<compile_context>
chip_gen: v7x
topology: tpu7x:2x2x1
jax: 0.10.0
libtpu: 0.0.40
codegen_flags: <defaults>
</compile_context>

<pallas_src>
from functools import partial

import jax
import jax.numpy as jnp
from jax import lax
from jax.experimental import pallas as pl
from jax.experimental.pallas import tpu as pltpu

IN_FEATURES = 32
HIDDEN = [32, 16, 8]
LAYER_DIMS = [(32, 32), (16, 32), (8, 16), (1, 8)]   # (out, in) per Linear layer

# Packed parameter slab layout (f32):
#   weights: layer li occupies rows [row_off, row_off+out) x cols [0, in)
#            with row_off = cumulative sum of previous out-dims (0, 32, 48, 56)
#   biases:  layer li occupies rows [0, out) x col (BIAS_COL0 + li)
SLAB_ROWS, SLAB_COLS = 64, 128
BIAS_COL0 = 64


def _cdiv(a, b):
    return -(-a // b)


def _round_up(a, b):
    return _cdiv(a, b) * b


def ebm_kernel(x_ref, y_ref, w_ref, out_ref):
    """One lane-dense batch tile.

    x_ref:  (TILE, 32) bf16  — natural layout, no HBM transpose
    y_ref:  (1, TILE)  f32
    w_ref:  (64, 128)  f32   — resident packed weight/bias slab
    out_ref:(1, TILE)  f32   — lane-dense energy
    """
    # ---- Layer 0: contract x's feature (last) axis directly: h0 = W0 @ x^T.
    # The batch lands on the MXU N/lane axis; the layout fix happens in VMEM.
    dout, din = LAYER_DIMS[0]
    w0 = w_ref[0:dout, 0:din].astype(jnp.bfloat16)                 # (32, 32)
    b0 = w_ref[0:dout, BIAS_COL0:BIAS_COL0 + 1]                    # (32, 1) f32
    h = lax.dot_general(w0, x_ref[...],
                        (((1,), (1,)), ((), ())),                  # contract x's last axis
                        preferred_element_type=jnp.float32) + b0   # (32, TILE) f32
    h = jnp.maximum(h, 0.0).astype(jnp.bfloat16)

    # ---- Remaining layers: W(out,in) @ H(in, TILE), batch stays on lanes.
    row = dout
    for li in range(1, len(LAYER_DIMS)):                           # unrolled (static)
        dout, din = LAYER_DIMS[li]
        w = w_ref[row:row + dout, 0:din].astype(jnp.bfloat16)      # (dout, din)
        b = w_ref[0:dout, BIAS_COL0 + li:BIAS_COL0 + li + 1]       # (dout, 1) f32
        h = jnp.dot(w, h, preferred_element_type=jnp.float32) + b  # (dout, TILE) f32
        if li < len(LAYER_DIMS) - 1:
            h = jnp.maximum(h, 0.0).astype(jnp.bfloat16)
        row += dout

    d = h - y_ref[...]                                             # (1, TILE) f32
    out_ref[...] = 0.5 * d * d                                     # lane-dense store


def pack_params(params):
    """Pack [(W(out,in), b(out,)), ...] into one (64,128) f32 slab. Call ONCE."""
    slab = jnp.zeros((SLAB_ROWS, SLAB_COLS), jnp.float32)
    row = 0
    for li, (w, b) in enumerate(params):
        dout, din = w.shape
        slab = slab.at[row:row + dout, 0:din].set(w.astype(jnp.float32))
        slab = slab.at[0:dout, BIAS_COL0 + li].set(b.astype(jnp.float32))
        row += dout
    return slab


def _choose_batch_tile(B, *, max_tile=16384):
    """Large lane-dense tile (amortize ~0.35us/step), multiple of 128 (256 when
    possible), and >= 2 tiles when B allows so v7x can use both TensorCores."""
    if B <= 256:
        return _round_up(B, 128)
    n = max(2, _cdiv(B, max_tile))
    return min(max_tile, _round_up(_cdiv(B, n), 256))


@partial(jax.jit, static_argnames=("batch_tile",))
def _ebm_forward_jit(x, y, w_slab, *, batch_tile):
    B, F = x.shape
    assert F == IN_FEATURES
    assert batch_tile % 128 == 0, "batch_tile must be a multiple of 128 (lane width)"

    n_tiles = _cdiv(B, batch_tile)
    Bp = n_tiles * batch_tile
    pad = Bp - B

    # Cast to bf16 BEFORE the pad (half-width copy; cast+pad fuse under jit).
    xb = x.astype(jnp.float32).astype(jnp.bfloat16)                # (B, 32) natural layout
    y2 = y.astype(jnp.float32).reshape(1, B)                       # (1, B)
    if pad:
        xb = jnp.pad(xb, ((0, pad), (0, 0)))
        y2 = jnp.pad(y2, ((0, 0), (0, pad)))

    out = pl.pallas_call(
        ebm_kernel,
        out_shape=jax.ShapeDtypeStruct((1, Bp), jnp.float32),
        grid_spec=pltpu.PrefetchScalarGridSpec(
            num_scalar_prefetch=0,
            grid=(n_tiles,),
            in_specs=[
                pl.BlockSpec((batch_tile, IN_FEATURES), lambda i: (i, 0)),  # x, natural layout
                pl.BlockSpec((1, batch_tile), lambda i: (0, i)),            # y
                pl.BlockSpec((SLAB_ROWS, SLAB_COLS), lambda i: (0, 0)),     # slab (invariant)
            ],
            out_specs=pl.BlockSpec((1, batch_tile), lambda i: (0, i)),      # lane-dense energy
        ),
        compiler_params=pltpu.CompilerParams(
            dimension_semantics=("parallel",)),       # batch tiles shard across TCs
    )(xb, y2, w_slab)

    return out[0, :B]


def ebm_forward(x, y, w_slab, *, batch_tile=None):
    """x: (B, 32), y: (B,), w_slab: packed (64,128) slab -> energy: (B,) f32."""
    if batch_tile is None:
        batch_tile = _choose_batch_tile(x.shape[0])
    return _ebm_forward_jit(x, y, w_slab, batch_tile=batch_tile)


def init_params(key):
    """Xavier-uniform-like init, weights in torch (out, in) layout, bias = 0.01."""
    feat_sizes = [IN_FEATURES] + HIDDEN + [1]
    params = []
    for i in range(len(feat_sizes) - 1):
        fan_in, fan_out = feat_sizes[i], feat_sizes[i + 1]
        key, sub = jax.random.split(key)
        limit = jnp.sqrt(6.0 / (fan_in + fan_out))
        w = jax.random.uniform(sub, (fan_out, fan_in), jnp.float32, -limit, limit)
        b = jnp.full((fan_out,), 0.01, jnp.float32)
        params.append((w, b))
    return params


def ebm_reference(x, y, params):
    """Pure-JAX reference mirroring kernel numerics (bf16 weights/activations,
    f32 accumulation, f32 bias/energy)."""
    xb = x.astype(jnp.float32).astype(jnp.bfloat16)                # (B, 32)
    w0, b0 = params[0]
    h = lax.dot_general(w0.astype(jnp.bfloat16), xb,
                        (((1,), (1,)), ((), ())),
                        preferred_element_type=jnp.float32) + b0[:, None]
    h = jnp.maximum(h, 0.0).astype(jnp.bfloat16)
    for i in range(1, len(params)):
        w, b = params[i]
        h = jnp.dot(w.astype(jnp.bfloat16), h,
                    preferred_element_type=jnp.float32) + b[:, None]
        if i < len(params) - 1:
            h = jnp.maximum(h, 0.0).astype(jnp.bfloat16)
    return 0.5 * (h[0] - y.astype(jnp.float32)) ** 2


if __name__ == "__main__":
    key = jax.random.PRNGKey(0)
    k_x, k_y, k_p = jax.random.split(key, 3)

    B = 300  # not a multiple of any tile -> exercises the ragged pad/strip path
    x = jax.random.normal(k_x, (B, IN_FEATURES), jnp.float32)
    y = jax.random.normal(k_y, (B,), jnp.float32)
    params = init_params(k_p)
    w_slab = pack_params(params)          # hoisted: packed ONCE, reused per call

    energy_ref = ebm_reference(x, y, params)

    # adaptive tile (here 256 lanes x 2 tiles -> exercises the multi-tile grid)
    energy = jax.block_until_ready(ebm_forward(x, y, w_slab))
    assert energy.shape == (B,)
    assert jnp.allclose(energy, energy_ref, atol=1e-3, rtol=1e-3), (
        f"mismatch (auto tile): max diff {jnp.max(jnp.abs(energy - energy_ref))}")

    # explicit small tile -> more grid steps (checks index maps / tiling)
    energy_small = jax.block_until_ready(ebm_forward(x, y, w_slab, batch_tile=128))
    assert jnp.allclose(energy_small, energy_ref, atol=1e-3, rtol=1e-3), (
        f"mismatch (tile=128): max diff {jnp.max(jnp.abs(energy_small - energy_ref))}")

    print("KERNEL_OK")
</pallas_src>

<mosaic_0001>
module attributes {stable_mosaic.version = 11 : i64} {
  func.func @ebm_kernel(%arg0: i32, %arg1: memref<256x32xbf16, #tpu.memory_space<vmem>>, %arg2: memref<1x256xf32, #tpu.memory_space<vmem>>, %arg3: memref<64x128xf32, #tpu.memory_space<vmem>>, %arg4: memref<1x256xf32, #tpu.memory_space<vmem>>) attributes {dimension_semantics = [#tpu.dimension_semantics<parallel>], iteration_bounds = array<i64: 2>, scalar_prefetch = 0 : i64, scratch_operands = 0 : i64, tpu.core_type = #tpu.core_type<tc>, window_params = [{transform_indices = @transform_0, window_bounds = array<i64: 256, 32>}, {transform_indices = @transform_1, window_bounds = array<i64: 1, 256>}, {pipeline_mode = #tpu.pipeline_mode<synchronous>, transform_indices = @transform_2, window_bounds = array<i64: 64, 128>}, {transform_indices = @transform_3, window_bounds = array<i64: 1, 256>}]} {
    %c0 = arith.constant 0 : index
    %c0_0 = arith.constant 0 : index
    %0 = vector.load %arg3[%c0, %c0_0] : memref<64x128xf32, #tpu.memory_space<vmem>>, vector<32x32xf32>
    %1 = arith.truncf %0 : vector<32x32xf32> to vector<32x32xbf16>
    %c0_1 = arith.constant 0 : index
    %c64 = arith.constant 64 : index
    %2 = vector.load %arg3[%c0_1, %c64] : memref<64x128xf32, #tpu.memory_space<vmem>>, vector<32x1xf32>
    %c0_2 = arith.constant 0 : index
    %c0_3 = arith.constant 0 : index
    %3 = vector.load %arg1[%c0_2, %c0_3] : memref<256x32xbf16, #tpu.memory_space<vmem>>, vector<256x32xbf16>
    %cst = arith.constant dense<0.000000e+00> : vector<32x256xf32>
    %4 = tpu.matmul %1, %3, %cst {dimension_numbers = #tpu.dot_dimension_numbers<[1], [1], [0], [0], [0, 0, 1, 0], [], []>} : vector<32x32xbf16>, vector<256x32xbf16>, vector<32x256xf32> -> vector<32x256xf32>
    %5 = vector.broadcast %2 : vector<32x1xf32> to vector<32x256xf32>
    %6 = arith.addf %4, %5 : vector<32x256xf32>
    %cst_4 = arith.constant 0.000000e+00 : f32
    %7 = vector.broadcast %cst_4 : f32 to vector<32x256xf32>
    %8 = arith.maximumf %6, %7 : vector<32x256xf32>
    %9 = arith.truncf %8 : vector<32x256xf32> to vector<32x256xbf16>
    %c32 = arith.constant 32 : index
    %c0_5 = arith.constant 0 : index
    %10 = vector.load %arg3[%c32, %c0_5] : memref<64x128xf32, #tpu.memory_space<vmem>>, vector<16x32xf32>
    %11 = arith.truncf %10 : vector<16x32xf32> to vector<16x32xbf16>
    %c0_6 = arith.constant 0 : index
    %c65 = arith.constant 65 : index
    %12 = vector.load %arg3[%c0_6, %c65] : memref<64x128xf32, #tpu.memory_space<vmem>>, vector<16x1xf32>
    %cst_7 = arith.constant dense<0.000000e+00> : vector<16x256xf32>
    %13 = tpu.matmul %11, %9, %cst_7 {dimension_numbers = #tpu.dot_dimension_numbers<[1], [0], [0], [1], [0, 0, 1, 1], [], []>} : vector<16x32xbf16>, vector<32x256xbf16>, vector<16x256xf32> -> vector<16x256xf32>
    %14 = vector.broadcast %12 : vector<16x1xf32> to vector<16x256xf32>
    %15 = arith.addf %13, %14 : vector<16x256xf32>
    %cst_8 = arith.constant 0.000000e+00 : f32
    %16 = vector.broadcast %cst_8 : f32 to vector<16x256xf32>
    %17 = arith.maximumf %15, %16 : vector<16x256xf32>
    %18 = arith.truncf %17 : vector<16x256xf32> to vector<16x256xbf16>
    %c48 = arith.constant 48 : index
    %c0_9 = arith.constant 0 : index
    %19 = vector.load %arg3[%c48, %c0_9] : memref<64x128xf32, #tpu.memory_space<vmem>>, vector<8x16xf32>
    %20 = arith.truncf %19 : vector<8x16xf32> to vector<8x16xbf16>
    %c0_10 = arith.constant 0 : index
    %c66 = arith.constant 66 : index
    %21 = vector.load %arg3[%c0_10, %c66] : memref<64x128xf32, #tpu.memory_space<vmem>>, vector<8x1xf32>
    %cst_11 = arith.constant dense<0.000000e+00> : vector<8x256xf32>
    %22 = tpu.matmul %20, %18, %cst_11 {dimension_numbers = #tpu.dot_dimension_numbers<[1], [0], [0], [1], [0, 0, 1, 1], [], []>} : vector<8x16xbf16>, vector<16x256xbf16>, vector<8x256xf32> -> vector<8x256xf32>
    %23 = vector.broadcast %21 : vector<8x1xf32> to vector<8x256xf32>
    %24 = arith.addf %22, %23 : vector<8x256xf32>
    %cst_12 = arith.constant 0.000000e+00 : f32
    %25 = vector.broadcast %cst_12 : f32 to vector<8x256xf32>
    %26 = arith.maximumf %24, %25 : vector<8x256xf32>
    %27 = arith.truncf %26 : vector<8x256xf32> to vector<8x256xbf16>
    %c56 = arith.constant 56 : index
    %c0_13 = arith.constant 0 : index
    %28 = vector.load %arg3[%c56, %c0_13] : memref<64x128xf32, #tpu.memory_space<vmem>>, vector<1x8xf32>
    %29 = arith.truncf %28 : vector<1x8xf32> to vector<1x8xbf16>
    %c0_14 = arith.constant 0 : index
    %c67 = arith.constant 67 : index
    %30 = vector.load %arg3[%c0_14, %c67] : memref<64x128xf32, #tpu.memory_space<vmem>>, vector<1x1xf32>
    %cst_15 = arith.constant dense<0.000000e+00> : vector<1x256xf32>
    %31 = tpu.matmul %29, %27, %cst_15 {dimension_numbers = #tpu.dot_dimension_numbers<[1], [0], [0], [1], [0, 0, 1, 1], [], []>} : vector<1x8xbf16>, vector<8x256xbf16>, vector<1x256xf32> -> vector<1x256xf32>
    %32 = vector.broadcast %30 : vector<1x1xf32> to vector<1x256xf32>
    %33 = arith.addf %31, %32 : vector<1x256xf32>
    %c0_16 = arith.constant 0 : index
    %c0_17 = arith.constant 0 : index
    %34 = vector.load %arg2[%c0_16, %c0_17] : memref<1x256xf32, #tpu.memory_space<vmem>>, vector<1x256xf32>
    %35 = arith.subf %33, %34 : vector<1x256xf32>
    %cst_18 = arith.constant 5.000000e-01 : f32
    %36 = vector.broadcast %cst_18 : f32 to vector<1x256xf32>
    %37 = arith.mulf %36, %35 : vector<1x256xf32>
    %38 = arith.mulf %37, %35 : vector<1x256xf32>
    %c0_19 = arith.constant 0 : index
    %c0_20 = arith.constant 0 : index
    %39 = vector.load %arg4[%c0_19, %c0_20] : memref<1x256xf32, #tpu.memory_space<vmem>>, vector<1x256xf32>
    tpu.vector_store %arg4[%c0_19, %c0_20], %38 {strides = array<i32>} : memref<1x256xf32, #tpu.memory_space<vmem>>, vector<1x256xf32>,
    return
  }
  func.func @transform_0(%arg0: i32) -> (i32, i32) {
    %c0_i32 = arith.constant 0 : i32
    %c0_i32_0 = arith.constant 0 : i32
    return %arg0, %c0_i32 : i32, i32
  }
  func.func @transform_1(%arg0: i32) -> (i32, i32) {
    %c0_i32 = arith.constant 0 : i32
    %c0_i32_0 = arith.constant 0 : i32
    return %c0_i32, %arg0 : i32, i32
  }
  func.func @transform_2(%arg0: i32) -> (i32, i32) {
    %c0_i32 = arith.constant 0 : i32
    %c0_i32_0 = arith.constant 0 : i32
    %c0_i32_1 = arith.constant 0 : i32
    return %c0_i32, %c0_i32_0 : i32, i32
  }
  func.func @transform_3(%arg0: i32) -> (i32, i32) {
    %c0_i32 = arith.constant 0 : i32
    %c0_i32_0 = arith.constant 0 : i32
    return %c0_i32, %arg0 : i32, i32
  }
}

</mosaic_0001>

<llo_original>
// kernel: _ebm_forward_jit.1
$region0: #{_ebm_forward_jit.1}
  #allocation0 [shape = 'u32[]', space=smem, size = 0x4, offset = 0x4, fixed_abs, tag = 'smem constant byte address 0x4 - core index']
  #allocation1 [shape = 'u32[144,128]{1,0:T(1,128)}', space=vmem, size = 0x12000, scoped, tag = 'internal scratch']
  %s0 = inlined_call_operand.vmem [shape: bf16[512,32], index: 0, kind: input, shape index: {}]
  %s1 = inlined_call_operand.vmem [shape: f32[1,512], index: 1, kind: input, shape index: {}]
  %s2 = inlined_call_operand.vmem [shape: f32[64,128], index: 2, kind: input, shape index: {}]
  %s3 = inlined_call_operand.vmem [shape: f32[1,512], index: 3, kind: output, shape index: {}]
  %s4 = sld [smem:[#allocation0]]
  $region45: #{_ebm_forward_jit.1} parent=0
    _
  %s6 = ssub.s32 1, %s4
  %s7 = scalar_select 0, %s6, %s4
  loop: start=0, step=1, limit=4
  $region2: #{_ebm_forward_jit.1} parent=0 // loop_pre_header
    _
  $region3: #{_ebm_forward_jit.1} parent=0 // loop_header
    %s9 = sphi 0, %s13
    %p10 = scmp.ge.s32.totalorder %s9, 4
    %s19 = sphi 0, %s21
    %s22 = sphi 0, %s19
    %s23 = sphi 0, %s22
    %s39 = sphi 0, %s23
    %s45 = sphi 0, %s47
    %s48 = sphi 0, %s45
    %s49 = sphi 0, %s48
    %s65 = sphi 0, %s49
    %s69 = sphi 0, %s69
    %s71 = sphi 0, %s69
    %s72 = sphi 0, %s71
    %s86 = sphi 0, %s72
    %s92 = sphi 0, %s94
    %s95 = sphi 0, %s92
    %s96 = sphi 0, %s95
    %s112 = sphi 0, %s96
  $region4: #{_ebm_forward_jit.1} parent=0 // loop_header_branch
    %12 = sbr.rel (%p10) target = $region8
  $region5: #{_ebm_forward_jit.1} parent=0 // loop_body
    %s14 = ssub.s32 %s9, 1
    %s15 = ssub.s32 %s9, 2
    %s16 = sadd.s32 %s9, 1
    %s17 = ssub.s32 %s9, %s16
    %p18 = scmp.eq.s32.totalorder %s17, 0
    %s20 = sadd.s32 %s19, 1
    %s21 = scalar_select %p18, %s19, %s20
    %p24 = pneg %p18
    %p25 = scmp.eq.s32.totalorder %s9, 1
    %p26 = por %p24, %p25
    %p27 = scmp.ne.s32.totalorder %s19, %s22
    %p28 = scmp.eq.s32.totalorder %s9, 0
    %p29 = por %p27, %p28
    %p30 = scmp.ne.s32.totalorder %s19, %s22
    %p31 = scmp.eq.s32.totalorder %s14, 1
    %p32 = por %p30, %p31
    %p33 = scmp.ne.s32.totalorder %s22, %s23
    %p34 = scmp.eq.s32.totalorder %s14, 0
    %p35 = por %p33, %p34
    %p36 = scmp.ne.s32.totalorder %s22, %s23
    %p37 = scmp.eq.s32.totalorder %s15, 1
    %p38 = por %p36, %p37
    %p40 = scmp.ne.s32.totalorder %s23, %s39
    %p41 = scmp.eq.s32.totalorder %s15, 0
    %p42 = por %p40, %p41
    %s43 = ssub.s32 %s9, %s16
    %p44 = scmp.eq.s32.totalorder %s43, 0
    %s46 = sadd.s32 %s45, 1
    %s47 = scalar_select %p44, %s45, %s46
    %p50 = pneg %p44
    %p51 = scmp.eq.s32.totalorder %s9, 1
    %p52 = por %p50, %p51
    %p53 = scmp.ne.s32.totalorder %s45, %s48
    %p54 = scmp.eq.s32.totalorder %s9, 0
    %p55 = por %p53, %p54
    %p56 = scmp.ne.s32.totalorder %s45, %s48
    %p57 = scmp.eq.s32.totalorder %s14, 1
    %p58 = por %p56, %p57
    %p59 = scmp.ne.s32.totalorder %s48, %s49
    %p60 = scmp.eq.s32.totalorder %s14, 0
    %p61 = por %p59, %p60
    %p62 = scmp.ne.s32.totalorder %s48, %s49
    %p63 = scmp.eq.s32.totalorder %s15, 1
    %p64 = por %p62, %p63
    %p66 = scmp.ne.s32.totalorder %s49, %s65
    %p67 = scmp.eq.s32.totalorder %s15, 0
    %p68 = por %p66, %p67
    %s70 = sadd.s32 %s69, 1
    %p73 = scmp.eq.s32.totalorder %s9, 1
    %p74 = scmp.ne.s32.totalorder %s69, %s71
    %p75 = scmp.eq.s32.totalorder %s9, 0
    %p76 = por %p74, %p75
    %p77 = scmp.ne.s32.totalorder %s69, %s71
    %p78 = scmp.eq.s32.totalorder %s14, 1
    %p79 = por %p77, %p78
    %p80 = scmp.ne.s32.totalorder %s71, %s72
    %p81 = scmp.eq.s32.totalorder %s14, 0
    %p82 = por %p80, %p81
    %p83 = scmp.ne.s32.totalorder %s71, %s72
    %p84 = scmp.eq.s32.totalorder %s15, 1
    %p85 = por %p83, %p84
    %p87 = scmp.ne.s32.totalorder %s72, %s86
    %p88 = scmp.eq.s32.totalorder %s15, 0
    %p89 = por %p87, %p88
    %s90 = ssub.s32 %s9, %s16
    %p91 = scmp.eq.s32.totalorder %s90, 0
    %s93 = sadd.s32 %s92, 1
    %s94 = scalar_select %p91, %s92, %s93
    %p97 = pneg %p91
    %p98 = scmp.eq.s32.totalorder %s9, 1
    %p99 = por %p97, %p98
    %p100 = scmp.ne.s32.totalorder %s92, %s95
    %p101 = scmp.eq.s32.totalorder %s9, 0
    %p102 = por %p100, %p101
    %p103 = scmp.ne.s32.totalorder %s92, %s95
    %p104 = scmp.eq.s32.totalorder %s14, 1
    %p105 = por %p103, %p104
    %p106 = scmp.ne.s32.totalorder %s95, %s96
    %p107 = scmp.eq.s32.totalorder %s14, 0
    %p108 = por %p106, %p107
    %p109 = scmp.ne.s32.totalorder %s95, %s96
    %p110 = scmp.eq.s32.totalorder %s15, 1
    %p111 = por %p109, %p110
    %p113 = scmp.ne.s32.totalorder %s96, %s112
    %p114 = scmp.eq.s32.totalorder %s15, 0
    %p115 = por %p113, %p114
    %p116 = scmp.le.s32.totalorder 1, %s9
    %p117 = scmp.lt.s32.totalorder %s9, 3
    %p118 = pnand %p116, %p117
    %p119 = pneg %p118
    // Predicated region
    $region9: #{_ebm_forward_jit.1} parent=5 // pred_check
      _
    $region10: #{_ebm_forward_jit.1} parent=5 // pred_check_branch
      %121 = sbr.rel (%p118) target = $region12
    $region11: #{_ebm_forward_jit.1} parent=5 // pred_region
      %s122 = ssub.s32 %s9, 1
      // Predicated region
      $region13: #{_ebm_forward_jit.1} parent=11 // pred_check
        %p123 = pneg %p82
      $region14: #{_ebm_forward_jit.1} parent=11 // pred_check_branch
        %125 = sbr.rel (%p123) target = $region16
      $region15: #{_ebm_forward_jit.1} parent=11 // pred_region
        _
      $region16: #{_ebm_forward_jit.1} parent=11 // pred_fallthru
        _
    $region12: #{_ebm_forward_jit.1} parent=5 // pred_fallthru
      _
    %p126 = scmp.lt.s32.totalorder %s9, 2
    // Predicated region
    $region17: #{_ebm_forward_jit.1} parent=5 // pred_check
      %p127 = pneg %p126
    $region18: #{_ebm_forward_jit.1} parent=5 // pred_check_branch
      %129 = sbr.rel (%p127) target = $region20
    $region19: #{_ebm_forward_jit.1} parent=5 // pred_region
      // Predicated region
      $region21: #{_ebm_forward_jit.1} parent=19 // pred_check
        %p130 = pneg %p29
      $region22: #{_ebm_forward_jit.1} parent=19 // pred_check_branch
        %132 = sbr.rel (%p130) target = $region24
      $region23: #{_ebm_forward_jit.1} parent=19 // pred_region
        %s133 = smul.u32 32, %s9
        %p134 = scmp.lt.s32.totalorder %s133, 63
        %s135 = scalar_select %p134, %s133, 63
        %s136 = smul.addr %s135, 4
        %s137 = scalar_lea.vmem %s0, %s136
        %s138 = smul.u32 32, %s9
      $region24: #{_ebm_forward_jit.1} parent=19 // pred_fallthru
        _
      // Predicated region
      $region25: #{_ebm_forward_jit.1} parent=19 // pred_check
        %p139 = pneg %p55
      $region26: #{_ebm_forward_jit.1} parent=19 // pred_check_branch
        %141 = sbr.rel (%p139) target = $region28
      $region27: #{_ebm_forward_jit.1} parent=19 // pred_region
        %s142 = smul.u32 2, %s9
        %p143 = scmp.lt.s32.totalorder %s142, 3
        %s144 = scalar_select %p143, %s142, 3
        %s145 = scalar_lea.vmem %s1, %s144
        %s146 = smul.u32 2, %s9
      $region28: #{_ebm_forward_jit.1} parent=19 // pred_fallthru
        _
    $region20: #{_ebm_forward_jit.1} parent=5 // pred_fallthru
      _
    %p147 = scmp.le.s32.totalorder 1, %s9
    %p148 = scmp.lt.s32.totalorder %s9, 3
    %p149 = pnand %p147, %p148
    %p150 = pneg %p149
    // Predicated region
    $region29: #{_ebm_forward_jit.1} parent=5 // pred_check
      _
    $region30: #{_ebm_forward_jit.1} parent=5 // pred_check_branch
      %152 = sbr.rel (%p149) target = $region32
    $region31: #{_ebm_forward_jit.1} parent=5 // pred_region
      %s153 = ssub.s32 %s9, 1
      %s154 = smul.u32 32, %s14
      %p155 = scmp.lt.s32.totalorder %s154, 63
      %s156 = scalar_select %p155, %s154, 63
      %s157 = smul.addr %s156, 4
      %s158 = scalar_lea.vmem %s0, %s157
      %p159 = pneg %p35
      %p160 = pneg %p32
      %s161 = smul.u32 2, %s14
      %p162 = scmp.lt.s32.totalorder %s161, 3
      %s163 = scalar_select %p162, %s161, 3
      %s164 = scalar_lea.vmem %s1, %s163
      %p165 = pneg %p61
      %p166 = pneg %p58
      %p167 = pneg %p82
      %p168 = pneg %p79
      %p169 = pneg %p108
      %p170 = pneg %p105
      %s171 = smul.u32 2, %s14
      %p172 = scmp.lt.s32.totalorder %s171, 3
      %s173 = scalar_select %p172, %s171, 3
      %s174 = scalar_lea.vmem %s3, %s173
      %s175 = smul.u32 32, %s14
      %p176 = scmp.lt.s32.totalorder %s175, 63
      %s177 = scalar_select %p176, %s175, 63
      %s178 = smul.addr %s177, 4
      %s179 = scalar_lea.vmem %s0, %s178
      %s180 = smul.u32 32, %s14
      %s181 = smul.u32 2, %s14
      %p182 = scmp.lt.s32.totalorder %s181, 3
      %s183 = scalar_select %p182, %s181, 3
      %s184 = scalar_lea.vmem %s1, %s183
      %s185 = smul.u32 2, %s14
      %s186 = smul.u32 2, %s14
      %p187 = scmp.lt.s32.totalorder %s186, 3
      %s188 = scalar_select %p187, %s186, 3
      %s189 = scalar_lea.vmem %s3, %s188
      %s190 = smul.u32 2, %s14
      %v192 = vld [vmem:[%s2] sm:$0xff]
      %v193 = vld [vmem:[%s2 + $0x8] sm:$0xff]
      %v194 = vld [vmem:[%s2 + $0x10] sm:$0xff]
      %v195 = vld [vmem:[%s2 + $0x18] sm:$0xff]
      %v196 = vpack.c.bf16 %v193, %v192
      %v197 = vpack.c.bf16 %v195, %v194
      %v198 = vld [vmem:[%s179] sm:$0xf]
      %v199 = vld [vmem:[%s179 + $0x4] sm:$0xf]
      %v200 = vld [vmem:[%s179 + $0x8] sm:$0xf]
      %v201 = vld [vmem:[%s179 + $0xc] sm:$0xf]
      %v202 = vld [vmem:[%s179 + $0x10] sm:$0xf]
      %v203 = vld [vmem:[%s179 + $0x14] sm:$0xf]
      %v204 = vld [vmem:[%s179 + $0x18] sm:$0xf]
      %v205 = vld [vmem:[%s179 + $0x1c] sm:$0xf]
      %v206 = vld [vmem:[%s179 + $0x20] sm:$0xf]
      %v207 = vld [vmem:[%s179 + $0x24] sm:$0xf]
      %v208 = vld [vmem:[%s179 + $0x28] sm:$0xf]
      %v209 = vld [vmem:[%s179 + $0x2c] sm:$0xf]
      %v210 = vld [vmem:[%s179 + $0x30] sm:$0xf]
      %v211 = vld [vmem:[%s179 + $0x34] sm:$0xf]
      %v212 = vld [vmem:[%s179 + $0x38] sm:$0xf]
      %v213 = vld [vmem:[%s179 + $0x3c] sm:$0xf]
      %v214 = vld [vmem:[%s179 + $0x40] sm:$0xf]
      %v215 = vld [vmem:[%s179 + $0x44] sm:$0xf]
      %v216 = vld [vmem:[%s179 + $0x48] sm:$0xf]
      %v217 = vld [vmem:[%s179 + $0x4c] sm:$0xf]
      %v218 = vld [vmem:[%s179 + $0x50] sm:$0xf]
      %v219 = vld [vmem:[%s179 + $0x54] sm:$0xf]
      %v220 = vld [vmem:[%s179 + $0x58] sm:$0xf]
      %v221 = vld [vmem:[%s179 + $0x5c] sm:$0xf]
      %v222 = vld [vmem:[%s179 + $0x60] sm:$0xf]
      %v223 = vld [vmem:[%s179 + $0x64] sm:$0xf]
      %v224 = vld [vmem:[%s179 + $0x68] sm:$0xf]
      %v225 = vld [vmem:[%s179 + $0x6c] sm:$0xf]
      %v226 = vld [vmem:[%s179 + $0x70] sm:$0xf]
      %v227 = vld [vmem:[%s179 + $0x74] sm:$0xf]
      %v228 = vld [vmem:[%s179 + $0x78] sm:$0xf]
      %v229 = vld [vmem:[%s179 + $0x7c] sm:$0xf]
      %231 = vset.pattern.permute.xlu0 64
      %232 = vperm.xlu0 %231, %v192
      %v233 = vpop.permute.xlu0 %232
      %236 = vset.pattern.permute.xlu0 64
      %237 = vperm.xlu0 %236, %v193
      %v238 = vpop.permute.xlu0 %237
      %241 = vset.pattern.permute.xlu0 64
      %242 = vperm.xlu0 %241, %v194
      %v243 = vpop.permute.xlu0 %242
      %246 = vset.pattern.permute.xlu0 64
      %247 = vperm.xlu0 %246, %v195
      %v248 = vpop.permute.xlu0 %247
      %v282 = vunpack.c.l.b16 %v198
      %v283 = vunpack.c.l.b16 %v199
      %v284 = vunpack.c.l.b16 %v200
      %v285 = vunpack.c.l.b16 %v201
      %v286 = vunpack.c.l.b16 %v202
      %v287 = vunpack.c.l.b16 %v203
      %v288 = vunpack.c.l.b16 %v204
      %v289 = vunpack.c.l.b16 %v205
      %v290 = vunpack.c.l.b16 %v206
      %v291 = vunpack.c.l.b16 %v207
      %v292 = vunpack.c.l.b16 %v208
      %v293 = vunpack.c.l.b16 %v209
      %v294 = vunpack.c.l.b16 %v210
      %v295 = vunpack.c.l.b16 %v211
      %v296 = vunpack.c.l.b16 %v212
      %v297 = vunpack.c.l.b16 %v213
      %v298 = vunpack.c.l.b16 %v214
      %v299 = vunpack.c.l.b16 %v215
      %v300 = vunpack.c.l.b16 %v216
      %v301 = vunpack.c.l.b16 %v217
      %v302 = vunpack.c.l.b16 %v218
      %v303 = vunpack.c.l.b16 %v219
      %v304 = vunpack.c.l.b16 %v220
      %v305 = vunpack.c.l.b16 %v221
      %v306 = vunpack.c.l.b16 %v222
      %v307 = vunpack.c.l.b16 %v223
      %v308 = vunpack.c.l.b16 %v224
      %v309 = vunpack.c.l.b16 %v225
      %v310 = vunpack.c.l.b16 %v226
      %v311 = vunpack.c.l.b16 %v227
      %v312 = vunpack.c.l.b16 %v228
      %v313 = vunpack.c.l.b16 %v229
      %v314 = vpack.c.b16 %v283, %v282
      %v315 = vpack.c.b16 %v285, %v284
      %v316 = vpack.c.b16 %v287, %v286
      %v317 = vpack.c.b16 %v289, %v288
      %v318 = vpack.c.b16 %v291, %v290
      %v319 = vpack.c.b16 %v293, %v292
      %v320 = vpack.c.b16 %v295, %v294
      %v321 = vpack.c.b16 %v297, %v296
      %v322 = vpack.c.b16 %v299, %v298
      %v323 = vpack.c.b16 %v301, %v300
      %v324 = vpack.c.b16 %v303, %v302
      %v325 = vpack.c.b16 %v305, %v304
      %v326 = vpack.c.b16 %v307, %v306
      %v327 = vpack.c.b16 %v309, %v308
      %v328 = vpack.c.b16 %v311, %v310
      %v329 = vpack.c.b16 %v313, %v312
      %vm330 = vcmask 261120
      %v332 = vsel %vm330, %v196, 0
      %v335 = vsel %vm330, %v197, 0
      %v338 = vsel %vm330, %v314, 0
      %v341 = vsel %vm330, %v315, 0
      %v344 = vsel %vm330, %v316, 0
      %v347 = vsel %vm330, %v317, 0
      %v350 = vsel %vm330, %v318, 0
      %v353 = vsel %vm330, %v319, 0
      %v356 = vsel %vm330, %v320, 0
      %v359 = vsel %vm330, %v321, 0
      %v362 = vsel %vm330, %v322, 0
      %v365 = vsel %vm330, %v323, 0
      %v368 = vsel %vm330, %v324, 0
      %v371 = vsel %vm330, %v325, 0
      %v374 = vsel %vm330, %v326, 0
      %v377 = vsel %vm330, %v327, 0
      %v380 = vsel %vm330, %v328, 0
      %v383 = vsel %vm330, %v329, 0
      %385 = vmatprep.subr.bf16.mxu0 0
      %386 = vmatpush1.bf16.xpose.msra.mxu0 %v338
      %387 = vmatprep.subr.bf16.mxu0 0
      %388 = vmatpush1.bf16.xpose.msra.mxu0 %v341
      %389 = vmatprep.subr.bf16.mxu0 0
      %390 = vmatpush1.bf16.xpose.msra.mxu0 %v344
      %391 = vmatprep.subr.bf16.mxu0 0
      %392 = vmatpush1.bf16.xpose.msra.mxu0 %v347
      %393 = vmatprep.subr.bf16.mxu0 0
      %394 = vmatpush1.bf16.xpose.msra.mxu0 %v350
      %395 = vmatprep.subr.bf16.mxu0 0
      %396 = vmatpush1.bf16.xpose.msra.mxu0 %v353
      %397 = vmatprep.subr.bf16.mxu0 0
      %398 = vmatpush1.bf16.xpose.msra.mxu0 %v356
      %399 = vmatprep.subr.bf16.mxu0 0
      %400 = vmatpush1.bf16.xpose.msra.mxu0 %v359
      %401 = vmatprep.subr.bf16.mxu0 0
      %402 = vmatpush1.bf16.xpose.msra.mxu0 %v362
      %403 = vmatprep.subr.bf16.mxu0 0
      %404 = vmatpush1.bf16.xpose.msra.mxu0 %v365
      %405 = vmatprep.subr.bf16.mxu0 0
      %406 = vmatpush1.bf16.xpose.msra.mxu0 %v368
      %407 = vmatprep.subr.bf16.mxu0 0
      %408 = vmatpush1.bf16.xpose.msra.mxu0 %v371
      %409 = vmatprep.subr.bf16.mxu0 0
      %410 = vmatpush1.bf16.xpose.msra.mxu0 %v374
      %411 = vmatprep.subr.bf16.mxu0 0
      %412 = vmatpush1.bf16.xpose.msra.mxu0 %v377
      %413 = vmatprep.subr.bf16.mxu0 0
      %414 = vmatpush1.bf16.xpose.msra.mxu0 %v380
      %415 = vmatprep.subr.bf16.mxu0 0
      %416 = vmatpush1.bf16.xpose.msra.mxu0 %v383
      %417 = vmatprep.mubr.bf16.mxu0 0
      %418 = vmatmul.mubr.bf16.gmra.mrb[0].mxu0 %v332
      %v419 = vpop.f32.mrb[0].mxu0
      %v420 = vadd.f32 %v233, %v419
      %v421 = vpop.f32.mrb[0].mxu0
      %v422 = vadd.f32 %v233, %v421
      %v423 = vpop.f32.mrb[0].mxu0
      %v424 = vadd.f32 %v238, %v423
      %v425 = vpop.f32.mrb[0].mxu0
      %v426 = vadd.f32 %v238, %v425
      %427 = vmatprep.mubr.bf16.mxu0 0
      %428 = vmatmul.mubr.bf16.gmra.mrb[0].mxu0 %v335
      %v429 = vpop.f32.mrb[0].mxu0
      %v430 = vadd.f32 %v243, %v429
      %v431 = vpop.f32.mrb[0].mxu0
      %v432 = vadd.f32 %v243, %v431
      %v433 = vpop.f32.mrb[0].mxu0
      %v434 = vadd.f32 %v248, %v433
      %v435 = vpop.f32.mrb[0].mxu0
      %v436 = vadd.f32 %v248, %v435
      %437 = vdwg.mxu0
      %v438 = vmax.f32 %v420, 0.0
      %v439 = vmax.f32 %v422, 0.0
      %v440 = vmax.f32 %v424, 0.0
      %v441 = vmax.f32 %v426, 0.0
      %v442 = vmax.f32 %v430, 0.0
      %v443 = vmax.f32 %v432, 0.0
      %v444 = vmax.f32 %v434, 0.0
      %v445 = vmax.f32 %v436, 0.0
      %v446 = vpack.c.bf16 %v440, %v438
      %v447 = vpack.c.bf16 %v441, %v439
      %v448 = vpack.c.bf16 %v444, %v442
      %v449 = vpack.c.bf16 %v445, %v443
      %v450 = vld [vmem:[%s2 + $0x20] sm:$0xff]
      %v451 = vld [vmem:[%s2 + $0x28] sm:$0xff]
      %v452 = vpack.c.bf16 %v451, %v450
      %v453 = vld [vmem:[%s2] sm:$0xff]
      %v454 = vld [vmem:[%s2 + $0x8] sm:$0xff]
      %456 = vset.pattern.permute.xlu0 65
      %457 = vperm.xlu0 %456, %v453
      %v458 = vpop.permute.xlu0 %457
      %461 = vset.pattern.permute.xlu0 65
      %462 = vperm.xlu0 %461, %v454
      %v463 = vpop.permute.xlu0 %462
      %v466 = vsel %vm330, %v452, 0
      %468 = vmatprep.subr.bf16.mxu0 %v447
      %469 = vmatpush1.bf16.msra.mxu0 %v446
      %470 = vmatprep.subr.bf16.mxu0 %v449
      %471 = vmatpush1.bf16.msra.mxu0 %v448
      %472 = vmatprep.subr.bf16.mxu0 0
      %473 = vmatpush1.bf16.msra.mxu0 0
      %474 = vmatprep.subr.bf16.mxu0 0
      %475 = vmatpush1.bf16.msra.mxu0 0
      %476 = vmatprep.subr.bf16.mxu0 0
      %477 = vmatpush1.bf16.msra.mxu0 0
      %478 = vmatprep.subr.bf16.mxu0 0
      %479 = vmatpush1.bf16.msra.mxu0 0
      %480 = vmatprep.subr.bf16.mxu0 0
      %481 = vmatpush1.bf16.msra.mxu0 0
      %482 = vmatprep.subr.bf16.mxu0 0
      %483 = vmatpush1.bf16.msra.mxu0 0
      %484 = vmatprep.subr.bf16.mxu0 0
      %485 = vmatpush1.bf16.msra.mxu0 0
      %486 = vmatprep.subr.bf16.mxu0 0
      %487 = vmatpush1.bf16.msra.mxu0 0
      %488 = vmatprep.subr.bf16.mxu0 0
      %489 = vmatpush1.bf16.msra.mxu0 0
      %490 = vmatprep.subr.bf16.mxu0 0
      %491 = vmatpush1.bf16.msra.mxu0 0
      %492 = vmatprep.subr.bf16.mxu0 0
      %493 = vmatpush1.bf16.msra.mxu0 0
      %494 = vmatprep.subr.bf16.mxu0 0
      %495 = vmatpush1.bf16.msra.mxu0 0
      %496 = vmatprep.subr.bf16.mxu0 0
      %497 = vmatpush1.bf16.msra.mxu0 0
      %498 = vmatprep.subr.bf16.mxu0 0
      %499 = vmatpush1.bf16.msra.mxu0 0
      %500 = vmatprep.mubr.bf16.mxu0 0
      %501 = vmatmul.mubr.bf16.gmra.mrb[0].mxu0 %v466
      %v502 = vpop.f32.mrb[0].mxu0
      %v503 = vadd.f32 %v458, %v502
      %v504 = vpop.f32.mrb[0].mxu0
      %v505 = vadd.f32 %v458, %v504
      %v506 = vpop.f32.mrb[0].mxu0
      %v507 = vadd.f32 %v463, %v506
      %v508 = vpop.f32.mrb[0].mxu0
      %v509 = vadd.f32 %v463, %v508
      %510 = vdwg.mxu0
      %v511 = vmax.f32 %v503, 0.0
      %v512 = vmax.f32 %v505, 0.0
      %v513 = vmax.f32 %v507, 0.0
      %v514 = vmax.f32 %v509, 0.0
      %v515 = vpack.c.bf16 %v513, %v511
      %v516 = vpack.c.bf16 %v514, %v512
      %v517 = vld [vmem:[%s2 + $0x30] sm:$0xff]
      %v518 = vpack.c.bf16 %v517, %v517
      %v519 = vld [vmem:[%s2] sm:$0xff]
      %521 = vset.pattern.permute.xlu0 66
      %522 = vperm.xlu0 %521, %v519
      %v523 = vpop.permute.xlu0 %522
      %vm525 = vcmask 130048
      %v527 = vsel %vm525, %v518, 0
      %529 = vmatprep.subr.bf16.mxu0 %v516
      %530 = vmatpush1.bf16.msra.mxu0 %v515
      %531 = vmatprep.subr.bf16.mxu0 0
      %532 = vmatpush1.bf16.msra.mxu0 0
      %533 = vmatprep.subr.bf16.mxu0 0
      %534 = vmatpush1.bf16.msra.mxu0 0
      %535 = vmatprep.subr.bf16.mxu0 0
      %536 = vmatpush1.bf16.msra.mxu0 0
      %537 = vmatprep.subr.bf16.mxu0 0
      %538 = vmatpush1.bf16.msra.mxu0 0
      %539 = vmatprep.subr.bf16.mxu0 0
      %540 = vmatpush1.bf16.msra.mxu0 0
      %541 = vmatprep.subr.bf16.mxu0 0
      %542 = vmatpush1.bf16.msra.mxu0 0
      %543 = vmatprep.subr.bf16.mxu0 0
      %544 = vmatpush1.bf16.msra.mxu0 0
      %545 = vmatprep.subr.bf16.mxu0 0
      %546 = vmatpush1.bf16.msra.mxu0 0
      %547 = vmatprep.subr.bf16.mxu0 0
      %548 = vmatpush1.bf16.msra.mxu0 0
      %549 = vmatprep.subr.bf16.mxu0 0
      %550 = vmatpush1.bf16.msra.mxu0 0
      %551 = vmatprep.subr.bf16.mxu0 0
      %552 = vmatpush1.bf16.msra.mxu0 0
      %553 = vmatprep.subr.bf16.mxu0 0
      %554 = vmatpush1.bf16.msra.mxu0 0
      %555 = vmatprep.subr.bf16.mxu0 0
      %556 = vmatpush1.bf16.msra.mxu0 0
      %557 = vmatprep.subr.bf16.mxu0 0
      %558 = vmatpush1.bf16.msra.mxu0 0
      %559 = vmatprep.subr.bf16.mxu0 0
      %560 = vmatpush1.bf16.msra.mxu0 0
      %561 = vmatprep.mubr.bf16.mxu0 0
      %562 = vmatmul.mubr.bf16.gmra.mrb[0].mxu0 %v527
      %v563 = vpop.f32.mrb[0].mxu0
      %v564 = vadd.f32 %v523, %v563
      %v565 = vpop.f32.mrb[0].mxu0
      %v566 = vadd.f32 %v523, %v565
      %v567 = vpop.f32.mrb[0].mxu0
      %v568 = vpop.f32.mrb[0].mxu0
      %569 = vdwg.mxu0
      %v570 = vmax.f32 %v564, 0.0
      %v571 = vmax.f32 %v566, 0.0
      %v572 = vpack.c.bf16 %v570, %v570
      %v573 = vpack.c.bf16 %v571, %v571
      %v574 = vld [vmem:[%s2 + $0x38] sm:$0x1]
      %v575 = vpack.c.bf16 %v574, %v574
      %v576 = vld [vmem:[%s2] sm:$0x1]
      %578 = vset.pattern.permute.xlu0 67
      %579 = vperm.xlu0 %578, %v576
      %v580 = vpop.permute.xlu0 %579
      %vm582 = vcmask 64512
      %v584 = vsel %vm582, %v575, 0
      %vm586 = vcmask 1043456
      %v588 = vsel %vm586, %v572, 0
      %v591 = vsel %vm586, %v573, 0
      %593 = vmatprep.subr.bf16.mxu0 %v591
      %594 = vmatpush1.bf16.msra.mxu0 %v588
      %595 = vmatprep.subr.bf16.mxu0 0
      %596 = vmatpush1.bf16.msra.mxu0 0
      %597 = vmatprep.subr.bf16.mxu0 0
      %598 = vmatpush1.bf16.msra.mxu0 0
      %599 = vmatprep.subr.bf16.mxu0 0
      %600 = vmatpush1.bf16.msra.mxu0 0
      %601 = vmatprep.subr.bf16.mxu0 0
      %602 = vmatpush1.bf16.msra.mxu0 0
      %603 = vmatprep.subr.bf16.mxu0 0
      %604 = vmatpush1.bf16.msra.mxu0 0
      %605 = vmatprep.subr.bf16.mxu0 0
      %606 = vmatpush1.bf16.msra.mxu0 0
      %607 = vmatprep.subr.bf16.mxu0 0
      %608 = vmatpush1.bf16.msra.mxu0 0
      %609 = vmatprep.subr.bf16.mxu0 0
      %610 = vmatpush1.bf16.msra.mxu0 0
      %611 = vmatprep.subr.bf16.mxu0 0
      %612 = vmatpush1.bf16.msra.mxu0 0
      %613 = vmatprep.subr.bf16.mxu0 0
      %614 = vmatpush1.bf16.msra.mxu0 0
      %615 = vmatprep.subr.bf16.mxu0 0
      %616 = vmatpush1.bf16.msra.mxu0 0
      %617 = vmatprep.subr.bf16.mxu0 0
      %618 = vmatpush1.bf16.msra.mxu0 0
      %619 = vmatprep.subr.bf16.mxu0 0
      %620 = vmatpush1.bf16.msra.mxu0 0
      %621 = vmatprep.subr.bf16.mxu0 0
      %622 = vmatpush1.bf16.msra.mxu0 0
      %623 = vmatprep.subr.bf16.mxu0 0
      %624 = vmatpush1.bf16.msra.mxu0 0
      %625 = vmatprep.mubr.bf16.mxu0 0
      %626 = vmatmul.mubr.bf16.gmra.mrb[0].mxu0 %v584
      %v627 = vpop.f32.mrb[0].mxu0
      %v628 = vadd.f32 %v580, %v627
      %v629 = vpop.f32.mrb[0].mxu0
      %v630 = vadd.f32 %v580, %v629
      %v631 = vpop.f32.mrb[0].mxu0
      %v632 = vpop.f32.mrb[0].mxu0
      %633 = vdwg.mxu0
      %v634 = vld [vmem:[%s184] sm:$0x3]
      %v636 = vlaneseq
      %v637 = vshrl.u32 %v636, 7
      %v638 = vsub.s32 0, %v637
      %v639 = vrot.slane %v634, %v638
      %v640 = vlaneseq
      %v641 = vshrl.u32 %v640, 7
      %v642 = vsub.s32 1, %v641
      %v643 = vrot.slane %v634, %v642
      %v646 = vsub.f32 %v628, %v639
      %v647 = vsub.f32 %v630, %v643
      %v648 = vmul.f32 %v646, 0.5
      %v649 = vmul.f32 %v647, 0.5
      %v650 = vmul.f32 %v648, %v646
      %v651 = vmul.f32 %v649, %v647
      %v654 = vcombine.low %v650, %v651
      %v656 = vunpack.c.l.s4 1966171168
      %v657 = vunpack.c.0.s8 %v656
      %v658 = vlaneseq
      %v659 = vshrl.u32 %v658, 7
      %v660 = vsub.s32 %v657, %v659
      %v661 = vrot.slane %v654, %v660
      %v663 = vunpack.c.l.s4 1966171168
      %v664 = vunpack.c.0.s8 %v663
      %v665 = vlaneseq
      %v666 = vshrl.u32 %v665, 7
      %v667 = vsub.s32 %v664, %v666
      %v668 = vrot.slane %v661, %v667
      %v670 = vlaneseq
      %vm671 = vcmp.ge.s32.totalorder %v670, 0
      %vm672 = vcmp.lt.s32.totalorder %v670, 256
      %vm673 = vmand %vm671, %vm672
      %674 = vst.msk [vmem:[%s189] sm:$0x3] %vm673, %v668
      %s675 = smul.u32 2, %s14
      %p676 = scmp.lt.s32.totalorder %s675, 3
      %s677 = scalar_select %p676, %s675, 3
      %s678 = scalar_lea.vmem %s3, %s677
      // Predicated region
      $region33: #{_ebm_forward_jit.1} parent=31 // pred_check
        %p679 = pneg %p105
      $region34: #{_ebm_forward_jit.1} parent=31 // pred_check_branch
        %681 = sbr.rel (%p679) target = $region36
      $region35: #{_ebm_forward_jit.1} parent=31 // pred_region
        %s682 = smul.u32 2, %s14
      $region36: #{_ebm_forward_jit.1} parent=31 // pred_fallthru
        _
    $region32: #{_ebm_forward_jit.1} parent=5 // pred_fallthru
      _
    %p683 = scmp.le.s32.totalorder 2, %s9
    // Predicated region
    $region37: #{_ebm_forward_jit.1} parent=5 // pred_check
      %p684 = pneg %p683
    $region38: #{_ebm_forward_jit.1} parent=5 // pred_check_branch
      %686 = sbr.rel (%p684) target = $region40
    $region39: #{_ebm_forward_jit.1} parent=5 // pred_region
      %s687 = ssub.s32 %s9, 2
      // Predicated region
      $region41: #{_ebm_forward_jit.1} parent=39 // pred_check
        %p688 = pneg %p111
      $region42: #{_ebm_forward_jit.1} parent=39 // pred_check_branch
        %690 = sbr.rel (%p688) target = $region44
      $region43: #{_ebm_forward_jit.1} parent=39 // pred_region
        %s691 = smul.u32 2, %s15
        %p692 = scmp.lt.s32.totalorder %s691, 3
        %s693 = scalar_select %p692, %s691, 3
        %s694 = scalar_lea.vmem %s3, %s693
      $region44: #{_ebm_forward_jit.1} parent=39 // pred_fallthru
        _
    $region40: #{_ebm_forward_jit.1} parent=5 // pred_fallthru
      _
  $region6: #{_ebm_forward_jit.1} parent=0 // loop_footer
    %s13 = sadd.s32 1, %s9
  $region7: #{_ebm_forward_jit.1} parent=0 // loop_footer_branch
    %8 = sbr.rel target = $region3
  $region8: #{_ebm_forward_jit.1} parent=0 // loop_exit
    _

</llo_original>
